<compile_context>
chip_gen: v6e
topology: v6e:2x2x1
jax: 0.10.0
libtpu: 0.0.40
codegen_flags: <defaults>
</compile_context>

<pallas_src>
import functools

import jax
import jax.numpy as jnp
from jax.experimental import pallas as pl
from jax.experimental.pallas import tpu as pltpu


def _round_up(x, m):
    return (x + m - 1) // m * m


def charcnn_kernel(ids_ref, m_ref, b_ref, o_ref, *, L, Vp, H):
    """One grid step: TB batch rows -> (TB, L*H) conv outputs.

    ids_ref: (TB, 3*L) int32  columns [0:L)=prev ids, [L:2L)=cur ids + Vp,
                              [2L:3L)=next ids + 2*Vp; -1 marks zero padding.
    m_ref:   (3*Vp, H) f32    stacked folded taps (emb_table @ W_k).
    b_ref:   (1, L*H)  f32    conv bias tiled over positions.
    o_ref:   (TB, L*H) f32    lane-dense output block.
    """
    ids = ids_ref[...]                                  # (TB, 3L) int32
    m = m_ref[...]                                      # (3Vp, H) f32
    tb = ids.shape[0]
    iota = jax.lax.broadcasted_iota(jnp.int32, (tb, 3 * Vp), 1)

    outs = []
    for t in range(L):                                  # static unroll over word length
        # One-hot row selecting the (prev, cur, next) rows of the stacked M.
        oh = ((ids[:, t:t + 1] == iota)
              | (ids[:, L + t:L + t + 1] == iota)
              | (ids[:, 2 * L + t:2 * L + t + 1] == iota)).astype(m.dtype)
        # Embedding gather + all 3 conv taps in one MXU push: (TB,3Vp)@(3Vp,H)
        outs.append(jnp.dot(oh, m, preferred_element_type=jnp.float32))
    out = jnp.concatenate(outs, axis=1) + b_ref[...]    # (TB, L*H)
    o_ref[...] = out.astype(o_ref.dtype)


def charcnn_forward(inp, char_emb_table, conv_w, conv_b, *, max_batch_tile=256):
    """
    inp:            (B, L) int token ids
    char_emb_table: (V, E) f32
    conv_w:         (H, E, 3) f32  (PyTorch Conv1d weight layout)
    conv_b:         (H,)      f32
    returns:        (B, L*H) f32  == CharCNN.forward / get_all_hiddens
    """
    B, L = inp.shape
    H, E, K = conv_w.shape
    assert K == 3, "CharCNN uses kernel_size=3"
    V = char_emb_table.shape[0]
    Vp = _round_up(V, 8)

    # TODO(synk): self.char_drop (Dropout) is identity at inference; training-mode
    # dropout on the embeddings is not implemented (it would also prevent folding).

    # ---- fold the embedding table into the conv taps (exact, tiny XLA matmul) ----
    w_taps = jnp.transpose(conv_w, (2, 1, 0)).astype(jnp.float32)          # (3, E, H)
    m = jnp.einsum("ve,keh->kvh", char_emb_table.astype(jnp.float32), w_taps)
    m = jnp.pad(m, ((0, 0), (0, Vp - V), (0, 0)))                          # (3, Vp, H)
    m_stack = m.reshape(3 * Vp, H)
    bias_row = jnp.tile(conv_b.astype(jnp.float32), L).reshape(1, L * H)

    # ---- shifted id columns: conv pad=1 handled with a -1 sentinel in id space ----
    ids = inp.astype(jnp.int32)
    neg = jnp.full((B, 1), -1, jnp.int32)
    prev_ids = jnp.concatenate([neg, ids[:, :-1]], axis=1)                 # x[t-1]
    next_ids = jnp.concatenate([ids[:, 1:], neg], axis=1)                  # x[t+1]

    def _off(a, k):
        return jnp.where(a >= 0, a + k * Vp, -1)

    ids_cat = jnp.concatenate(
        [_off(prev_ids, 0), _off(ids, 1), _off(next_ids, 2)], axis=1)      # (B, 3L)

    # ---- batch tiling: many rows per grid step ----
    max_batch_tile = _round_up(max(max_batch_tile, 8), 8)
    TB = min(max_batch_tile, _round_up(B, 8))
    Bp = _round_up(B, TB)
    if Bp != B:
        ids_cat = jnp.pad(ids_cat, ((0, Bp - B), (0, 0)), constant_values=-1)

    kernel = functools.partial(charcnn_kernel, L=L, Vp=Vp, H=H)
    out = pl.pallas_call(
        kernel,
        out_shape=jax.ShapeDtypeStruct((Bp, L * H), jnp.float32),
        grid=(Bp // TB,),
        in_specs=[
            pl.BlockSpec((TB, 3 * L), lambda i: (i, 0)),
            pl.BlockSpec((3 * Vp, H), lambda i: (0, 0)),
            pl.BlockSpec((1, L * H), lambda i: (0, 0)),
        ],
        out_specs=pl.BlockSpec((TB, L * H), lambda i: (i, 0)),
        compiler_params=pltpu.CompilerParams(
            dimension_semantics=("parallel",)),
    )(ids_cat, m_stack, bias_row)

    return out[:B]


def _reference_forward(inp, char_emb_table, conv_w, conv_b):
    """Pure-JAX reference of the PyTorch forward (for correctness check)."""
    B, L = inp.shape
    H, E, _ = conv_w.shape
    emb = jnp.take(char_emb_table, inp, axis=0)                  # (B, L, E)
    x = jnp.transpose(emb, (0, 2, 1))                            # (B, E, L)  NCW
    out = jax.lax.conv_general_dilated(
        x, conv_w, window_strides=(1,), padding=((1, 1),),
        dimension_numbers=("NCH", "OIH", "NCH"))                 # (B, H, L)
    out = out + conv_b[None, :, None]
    return jnp.transpose(out, (0, 2, 1)).reshape(B, L * H)


if __name__ == "__main__":
    # Small deterministic config consistent with the module.
    alphabet_size = 20
    embedding_dim = 32   # E
    hidden_dim = 32      # H (char_hidden_dim)
    B, L = 2, 8

    key = jax.random.PRNGKey(0)
    k_emb, k_w, k_inp = jax.random.split(key, 3)

    # random_embedding: uniform(-scale, scale), scale = sqrt(3/E)
    scale = jnp.sqrt(3.0 / embedding_dim)
    char_emb_table = jax.random.uniform(
        k_emb, (alphabet_size, embedding_dim),
        minval=-scale, maxval=scale, dtype=jnp.float32)

    # Conv1d weight (H, E, 3): orthogonal-style init (deterministic synthetic),
    # bias constant 0.5 as in nn.init.constant_(bias, 0.5).
    w_flat = jax.random.normal(k_w, (hidden_dim, embedding_dim * 3), dtype=jnp.float32)
    q, _ = jnp.linalg.qr(w_flat.T)            # (E*3, H) orthonormal columns
    conv_w = q.T.reshape(hidden_dim, embedding_dim, 3).astype(jnp.float32)
    conv_b = jnp.full((hidden_dim,), 0.5, dtype=jnp.float32)

    inp = jax.random.randint(k_inp, (B, L), 0, alphabet_size, dtype=jnp.int32)

    out = charcnn_forward(inp, char_emb_table, conv_w, conv_b)
    out = jax.block_until_ready(out)

    ref = _reference_forward(inp, char_emb_table, conv_w, conv_b)
    assert out.shape == (B, L * hidden_dim)
    assert jnp.allclose(out, ref, atol=1e-4, rtol=1e-4), "mismatch vs reference"

    print("KERNEL_OK")
</pallas_src>

<mosaic_0001>
module attributes {stable_mosaic.version = 11 : i64} {
  func.func @charcnn_kernel(%arg0: i32, %arg1: memref<8x24xi32, #tpu.memory_space<vmem>>, %arg2: memref<72x32xf32, #tpu.memory_space<vmem>>, %arg3: memref<1x256xf32, #tpu.memory_space<vmem>>, %arg4: memref<8x256xf32, #tpu.memory_space<vmem>>) attributes {dimension_semantics = [#tpu.dimension_semantics<parallel>], iteration_bounds = array<i64: 1>, scalar_prefetch = 0 : i64, scratch_operands = 0 : i64, tpu.core_type = #tpu.core_type<tc>, window_params = [{transform_indices = @transform_0, window_bounds = array<i64: 8, 24>}, {pipeline_mode = #tpu.pipeline_mode<synchronous>, transform_indices = @transform_1, window_bounds = array<i64: 72, 32>}, {pipeline_mode = #tpu.pipeline_mode<synchronous>, transform_indices = @transform_2, window_bounds = array<i64: 1, 256>}, {transform_indices = @transform_3, window_bounds = array<i64: 8, 256>}]} {
    %c0 = arith.constant 0 : index
    %c0_0 = arith.constant 0 : index
    %0 = vector.load %arg1[%c0, %c0_0] : memref<8x24xi32, #tpu.memory_space<vmem>>, vector<8x24xi32>
    %c0_1 = arith.constant 0 : index
    %c0_2 = arith.constant 0 : index
    %1 = vector.load %arg2[%c0_1, %c0_2] : memref<72x32xf32, #tpu.memory_space<vmem>>, vector<72x32xf32>
    %2 = tpu.iota {dimensions = array<i32: 1>} : vector<8x72xi32>
    %3 = vector.extract_strided_slice %0 {offsets = [0, 0], sizes = [8, 1], strides = [1, 1]} : vector<8x24xi32> to vector<8x1xi32>
    %4 = vector.broadcast %3 : vector<8x1xi32> to vector<8x72xi32>
    %5 = arith.cmpi eq, %4, %2 : vector<8x72xi32>
    %6 = vector.extract_strided_slice %0 {offsets = [0, 8], sizes = [8, 1], strides = [1, 1]} : vector<8x24xi32> to vector<8x1xi32>
    %7 = vector.broadcast %6 : vector<8x1xi32> to vector<8x72xi32>
    %8 = arith.cmpi eq, %7, %2 : vector<8x72xi32>
    %9 = arith.ori %5, %8 : vector<8x72xi1>
    %10 = vector.extract_strided_slice %0 {offsets = [0, 16], sizes = [8, 1], strides = [1, 1]} : vector<8x24xi32> to vector<8x1xi32>
    %11 = vector.broadcast %10 : vector<8x1xi32> to vector<8x72xi32>
    %12 = arith.cmpi eq, %11, %2 : vector<8x72xi32>
    %13 = arith.ori %9, %12 : vector<8x72xi1>
    %14 = arith.extui %13 : vector<8x72xi1> to vector<8x72xi32>
    %15 = arith.sitofp %14 : vector<8x72xi32> to vector<8x72xf32>
    %cst = arith.constant dense<0.000000e+00> : vector<8x32xf32>
    %16 = tpu.matmul %15, %1, %cst {dimension_numbers = #tpu.dot_dimension_numbers<[1], [0], [0], [1], [0, 0, 1, 1], [], []>} : vector<8x72xf32>, vector<72x32xf32>, vector<8x32xf32> -> vector<8x32xf32>
    %17 = vector.extract_strided_slice %0 {offsets = [0, 1], sizes = [8, 1], strides = [1, 1]} : vector<8x24xi32> to vector<8x1xi32>
    %18 = vector.broadcast %17 : vector<8x1xi32> to vector<8x72xi32>
    %19 = arith.cmpi eq, %18, %2 : vector<8x72xi32>
    %20 = vector.extract_strided_slice %0 {offsets = [0, 9], sizes = [8, 1], strides = [1, 1]} : vector<8x24xi32> to vector<8x1xi32>
    %21 = vector.broadcast %20 : vector<8x1xi32> to vector<8x72xi32>
    %22 = arith.cmpi eq, %21, %2 : vector<8x72xi32>
    %23 = arith.ori %19, %22 : vector<8x72xi1>
    %24 = vector.extract_strided_slice %0 {offsets = [0, 17], sizes = [8, 1], strides = [1, 1]} : vector<8x24xi32> to vector<8x1xi32>
    %25 = vector.broadcast %24 : vector<8x1xi32> to vector<8x72xi32>
    %26 = arith.cmpi eq, %25, %2 : vector<8x72xi32>
    %27 = arith.ori %23, %26 : vector<8x72xi1>
    %28 = arith.extui %27 : vector<8x72xi1> to vector<8x72xi32>
    %29 = arith.sitofp %28 : vector<8x72xi32> to vector<8x72xf32>
    %cst_3 = arith.constant dense<0.000000e+00> : vector<8x32xf32>
    %30 = tpu.matmul %29, %1, %cst_3 {dimension_numbers = #tpu.dot_dimension_numbers<[1], [0], [0], [1], [0, 0, 1, 1], [], []>} : vector<8x72xf32>, vector<72x32xf32>, vector<8x32xf32> -> vector<8x32xf32>
    %31 = vector.extract_strided_slice %0 {offsets = [0, 2], sizes = [8, 1], strides = [1, 1]} : vector<8x24xi32> to vector<8x1xi32>
    %32 = vector.broadcast %31 : vector<8x1xi32> to vector<8x72xi32>
    %33 = arith.cmpi eq, %32, %2 : vector<8x72xi32>
    %34 = vector.extract_strided_slice %0 {offsets = [0, 10], sizes = [8, 1], strides = [1, 1]} : vector<8x24xi32> to vector<8x1xi32>
    %35 = vector.broadcast %34 : vector<8x1xi32> to vector<8x72xi32>
    %36 = arith.cmpi eq, %35, %2 : vector<8x72xi32>
    %37 = arith.ori %33, %36 : vector<8x72xi1>
    %38 = vector.extract_strided_slice %0 {offsets = [0, 18], sizes = [8, 1], strides = [1, 1]} : vector<8x24xi32> to vector<8x1xi32>
    %39 = vector.broadcast %38 : vector<8x1xi32> to vector<8x72xi32>
    %40 = arith.cmpi eq, %39, %2 : vector<8x72xi32>
    %41 = arith.ori %37, %40 : vector<8x72xi1>
    %42 = arith.extui %41 : vector<8x72xi1> to vector<8x72xi32>
    %43 = arith.sitofp %42 : vector<8x72xi32> to vector<8x72xf32>
    %cst_4 = arith.constant dense<0.000000e+00> : vector<8x32xf32>
    %44 = tpu.matmul %43, %1, %cst_4 {dimension_numbers = #tpu.dot_dimension_numbers<[1], [0], [0], [1], [0, 0, 1, 1], [], []>} : vector<8x72xf32>, vector<72x32xf32>, vector<8x32xf32> -> vector<8x32xf32>
    %45 = vector.extract_strided_slice %0 {offsets = [0, 3], sizes = [8, 1], strides = [1, 1]} : vector<8x24xi32> to vector<8x1xi32>
    %46 = vector.broadcast %45 : vector<8x1xi32> to vector<8x72xi32>
    %47 = arith.cmpi eq, %46, %2 : vector<8x72xi32>
    %48 = vector.extract_strided_slice %0 {offsets = [0, 11], sizes = [8, 1], strides = [1, 1]} : vector<8x24xi32> to vector<8x1xi32>
    %49 = vector.broadcast %48 : vector<8x1xi32> to vector<8x72xi32>
    %50 = arith.cmpi eq, %49, %2 : vector<8x72xi32>
    %51 = arith.ori %47, %50 : vector<8x72xi1>
    %52 = vector.extract_strided_slice %0 {offsets = [0, 19], sizes = [8, 1], strides = [1, 1]} : vector<8x24xi32> to vector<8x1xi32>
    %53 = vector.broadcast %52 : vector<8x1xi32> to vector<8x72xi32>
    %54 = arith.cmpi eq, %53, %2 : vector<8x72xi32>
    %55 = arith.ori %51, %54 : vector<8x72xi1>
    %56 = arith.extui %55 : vector<8x72xi1> to vector<8x72xi32>
    %57 = arith.sitofp %56 : vector<8x72xi32> to vector<8x72xf32>
    %cst_5 = arith.constant dense<0.000000e+00> : vector<8x32xf32>
    %58 = tpu.matmul %57, %1, %cst_5 {dimension_numbers = #tpu.dot_dimension_numbers<[1], [0], [0], [1], [0, 0, 1, 1], [], []>} : vector<8x72xf32>, vector<72x32xf32>, vector<8x32xf32> -> vector<8x32xf32>
    %59 = vector.extract_strided_slice %0 {offsets = [0, 4], sizes = [8, 1], strides = [1, 1]} : vector<8x24xi32> to vector<8x1xi32>
    %60 = vector.broadcast %59 : vector<8x1xi32> to vector<8x72xi32>
    %61 = arith.cmpi eq, %60, %2 : vector<8x72xi32>
    %62 = vector.extract_strided_slice %0 {offsets = [0, 12], sizes = [8, 1], strides = [1, 1]} : vector<8x24xi32> to vector<8x1xi32>
    %63 = vector.broadcast %62 : vector<8x1xi32> to vector<8x72xi32>
    %64 = arith.cmpi eq, %63, %2 : vector<8x72xi32>
    %65 = arith.ori %61, %64 : vector<8x72xi1>
    %66 = vector.extract_strided_slice %0 {offsets = [0, 20], sizes = [8, 1], strides = [1, 1]} : vector<8x24xi32> to vector<8x1xi32>
    %67 = vector.broadcast %66 : vector<8x1xi32> to vector<8x72xi32>
    %68 = arith.cmpi eq, %67, %2 : vector<8x72xi32>
    %69 = arith.ori %65, %68 : vector<8x72xi1>
    %70 = arith.extui %69 : vector<8x72xi1> to vector<8x72xi32>
    %71 = arith.sitofp %70 : vector<8x72xi32> to vector<8x72xf32>
    %cst_6 = arith.constant dense<0.000000e+00> : vector<8x32xf32>
    %72 = tpu.matmul %71, %1, %cst_6 {dimension_numbers = #tpu.dot_dimension_numbers<[1], [0], [0], [1], [0, 0, 1, 1], [], []>} : vector<8x72xf32>, vector<72x32xf32>, vector<8x32xf32> -> vector<8x32xf32>
    %73 = vector.extract_strided_slice %0 {offsets = [0, 5], sizes = [8, 1], strides = [1, 1]} : vector<8x24xi32> to vector<8x1xi32>
    %74 = vector.broadcast %73 : vector<8x1xi32> to vector<8x72xi32>
    %75 = arith.cmpi eq, %74, %2 : vector<8x72xi32>
    %76 = vector.extract_strided_slice %0 {offsets = [0, 13], sizes = [8, 1], strides = [1, 1]} : vector<8x24xi32> to vector<8x1xi32>
    %77 = vector.broadcast %76 : vector<8x1xi32> to vector<8x72xi32>
    %78 = arith.cmpi eq, %77, %2 : vector<8x72xi32>
    %79 = arith.ori %75, %78 : vector<8x72xi1>
    %80 = vector.extract_strided_slice %0 {offsets = [0, 21], sizes = [8, 1], strides = [1, 1]} : vector<8x24xi32> to vector<8x1xi32>
    %81 = vector.broadcast %80 : vector<8x1xi32> to vector<8x72xi32>
    %82 = arith.cmpi eq, %81, %2 : vector<8x72xi32>
    %83 = arith.ori %79, %82 : vector<8x72xi1>
    %84 = arith.extui %83 : vector<8x72xi1> to vector<8x72xi32>
    %85 = arith.sitofp %84 : vector<8x72xi32> to vector<8x72xf32>
    %cst_7 = arith.constant dense<0.000000e+00> : vector<8x32xf32>
    %86 = tpu.matmul %85, %1, %cst_7 {dimension_numbers = #tpu.dot_dimension_numbers<[1], [0], [0], [1], [0, 0, 1, 1], [], []>} : vector<8x72xf32>, vector<72x32xf32>, vector<8x32xf32> -> vector<8x32xf32>
    %87 = vector.extract_strided_slice %0 {offsets = [0, 6], sizes = [8, 1], strides = [1, 1]} : vector<8x24xi32> to vector<8x1xi32>
    %88 = vector.broadcast %87 : vector<8x1xi32> to vector<8x72xi32>
    %89 = arith.cmpi eq, %88, %2 : vector<8x72xi32>
    %90 = vector.extract_strided_slice %0 {offsets = [0, 14], sizes = [8, 1], strides = [1, 1]} : vector<8x24xi32> to vector<8x1xi32>
    %91 = vector.broadcast %90 : vector<8x1xi32> to vector<8x72xi32>
    %92 = arith.cmpi eq, %91, %2 : vector<8x72xi32>
    %93 = arith.ori %89, %92 : vector<8x72xi1>
    %94 = vector.extract_strided_slice %0 {offsets = [0, 22], sizes = [8, 1], strides = [1, 1]} : vector<8x24xi32> to vector<8x1xi32>
    %95 = vector.broadcast %94 : vector<8x1xi32> to vector<8x72xi32>
    %96 = arith.cmpi eq, %95, %2 : vector<8x72xi32>
    %97 = arith.ori %93, %96 : vector<8x72xi1>
    %98 = arith.extui %97 : vector<8x72xi1> to vector<8x72xi32>
    %99 = arith.sitofp %98 : vector<8x72xi32> to vector<8x72xf32>
    %cst_8 = arith.constant dense<0.000000e+00> : vector<8x32xf32>
    %100 = tpu.matmul %99, %1, %cst_8 {dimension_numbers = #tpu.dot_dimension_numbers<[1], [0], [0], [1], [0, 0, 1, 1], [], []>} : vector<8x72xf32>, vector<72x32xf32>, vector<8x32xf32> -> vector<8x32xf32>
    %101 = vector.extract_strided_slice %0 {offsets = [0, 7], sizes = [8, 1], strides = [1, 1]} : vector<8x24xi32> to vector<8x1xi32>
    %102 = vector.broadcast %101 : vector<8x1xi32> to vector<8x72xi32>
    %103 = arith.cmpi eq, %102, %2 : vector<8x72xi32>
    %104 = vector.extract_strided_slice %0 {offsets = [0, 15], sizes = [8, 1], strides = [1, 1]} : vector<8x24xi32> to vector<8x1xi32>
    %105 = vector.broadcast %104 : vector<8x1xi32> to vector<8x72xi32>
    %106 = arith.cmpi eq, %105, %2 : vector<8x72xi32>
    %107 = arith.ori %103, %106 : vector<8x72xi1>
    %108 = vector.extract_strided_slice %0 {offsets = [0, 23], sizes = [8, 1], strides = [1, 1]} : vector<8x24xi32> to vector<8x1xi32>
    %109 = vector.broadcast %108 : vector<8x1xi32> to vector<8x72xi32>
    %110 = arith.cmpi eq, %109, %2 : vector<8x72xi32>
    %111 = arith.ori %107, %110 : vector<8x72xi1>
    %112 = arith.extui %111 : vector<8x72xi1> to vector<8x72xi32>
    %113 = arith.sitofp %112 : vector<8x72xi32> to vector<8x72xf32>
    %cst_9 = arith.constant dense<0.000000e+00> : vector<8x32xf32>
    %114 = tpu.matmul %113, %1, %cst_9 {dimension_numbers = #tpu.dot_dimension_numbers<[1], [0], [0], [1], [0, 0, 1, 1], [], []>} : vector<8x72xf32>, vector<72x32xf32>, vector<8x32xf32> -> vector<8x32xf32>
    %115 = tpu.concatenate %16, %30, %44, %58, %72, %86, %100, %114 in 1 : vector<8x32xf32>, vector<8x32xf32>, vector<8x32xf32>, vector<8x32xf32>, vector<8x32xf32>, vector<8x32xf32>, vector<8x32xf32>, vector<8x32xf32> -> vector<8x256xf32>
    %c0_10 = arith.constant 0 : index
    %c0_11 = arith.constant 0 : index
    %116 = vector.load %arg3[%c0_10, %c0_11] : memref<1x256xf32, #tpu.memory_space<vmem>>, vector<1x256xf32>
    %117 = vector.broadcast %116 : vector<1x256xf32> to vector<8x256xf32>
    %118 = arith.addf %115, %117 : vector<8x256xf32>
    %c0_12 = arith.constant 0 : index
    %c0_13 = arith.constant 0 : index
    %119 = vector.load %arg4[%c0_12, %c0_13] : memref<8x256xf32, #tpu.memory_space<vmem>>, vector<8x256xf32>
    tpu.vector_store %arg4[%c0_12, %c0_13], %118 {strides = array<i32>} : memref<8x256xf32, #tpu.memory_space<vmem>>, vector<8x256xf32>,
    return
  }
  func.func @transform_0(%arg0: i32) -> (i32, i32) {
    %c0_i32 = arith.constant 0 : i32
    %c0_i32_0 = arith.constant 0 : i32
    return %arg0, %c0_i32 : i32, i32
  }
  func.func @transform_1(%arg0: i32) -> (i32, i32) {
    %c0_i32 = arith.constant 0 : i32
    %c0_i32_0 = arith.constant 0 : i32
    %c0_i32_1 = arith.constant 0 : i32
    return %c0_i32, %c0_i32_0 : i32, i32
  }
  func.func @transform_2(%arg0: i32) -> (i32, i32) {
    %c0_i32 = arith.constant 0 : i32
    %c0_i32_0 = arith.constant 0 : i32
    %c0_i32_1 = arith.constant 0 : i32
    return %c0_i32, %c0_i32_0 : i32, i32
  }
  func.func @transform_3(%arg0: i32) -> (i32, i32) {
    %c0_i32 = arith.constant 0 : i32
    %c0_i32_0 = arith.constant 0 : i32
    return %arg0, %c0_i32 : i32, i32
  }
}

</mosaic_0001>

<llo_original>
// kernel: tpu_custom_call.1
$region0: #{tpu_custom_call.1}
  #allocation0 [shape = 'u32[]', space=smem, size = 0x4, offset = 0x4, fixed_abs, tag = 'smem constant byte address 0x4 - core index']
  #allocation1 [shape = 'u32[144,128]{1,0:T(1,128)}', space=vmem, size = 0x12000, scoped, tag = 'internal scratch']
  %s0 = inlined_call_operand.vmem [shape: s32[8,24], index: 0, kind: input, shape index: {}]
  %s1 = inlined_call_operand.vmem [shape: f32[72,32], index: 1, kind: input, shape index: {}]
  %s2 = inlined_call_operand.vmem [shape: f32[1,256], index: 2, kind: input, shape index: {}]
  %s3 = inlined_call_operand.hbm [shape: f32[8,256], index: 3, kind: output, shape index: {}]
  %s4 = sld [smem:[#allocation0]]
  $region22: #{tpu_custom_call.1} parent=0
    _
  %s6 = ssub.s32 1, %s4
  %s7 = scalar_select 0, %s6, %s4
  $region1: #{tpu_custom_call.1} parent=0
    #allocation2 [shape = 'u8[8192]{0}', space=vmem, size = 0x2000, scoped, tag = 'output window, operand 0, single buffered']
    #allocation3 [shape = 's32[1]{0}', space=sflag, size = 0x4, scoped, tag = 'scoped memory for tpu_custom_call.1']
    %8 = vsyncpa [#allocation3], 0
    // Predicated region
    $region2: #{tpu_custom_call.1} parent=1 // pred_check
      _
    $region3: #{tpu_custom_call.1} parent=1 // pred_check_branch
      %10 = sbr.rel (0) target = $region5
    $region4: #{tpu_custom_call.1} parent=1 // pred_region
      _
    $region5: #{tpu_custom_call.1} parent=1 // pred_fallthru
      _
    // Predicated region
    $region6: #{tpu_custom_call.1} parent=1 // pred_check
      _
    $region7: #{tpu_custom_call.1} parent=1 // pred_check_branch
      %12 = sbr.rel (0) target = $region9
    $region8: #{tpu_custom_call.1} parent=1 // pred_region
      _
    $region9: #{tpu_custom_call.1} parent=1 // pred_fallthru
      _
    // Predicated region
    $region10: #{tpu_custom_call.1} parent=1 // pred_check
      _
    $region11: #{tpu_custom_call.1} parent=1 // pred_check_branch
      %14 = sbr.rel (0) target = $region13
    $region12: #{tpu_custom_call.1} parent=1 // pred_region
      _
    $region13: #{tpu_custom_call.1} parent=1 // pred_fallthru
      _
    %v15 = vld [vmem:[%s0] sm:$0xff]
    %v16 = vld [vmem:[%s1] sm:$0xff]
    %v17 = vld [vmem:[%s1 + $0x8] sm:$0xff]
    %v18 = vld [vmem:[%s1 + $0x10] sm:$0xff]
    %v19 = vld [vmem:[%s1 + $0x18] sm:$0xff]
    %v20 = vld [vmem:[%s1 + $0x20] sm:$0xff]
    %v21 = vld [vmem:[%s1 + $0x28] sm:$0xff]
    %v22 = vld [vmem:[%s1 + $0x30] sm:$0xff]
    %v23 = vld [vmem:[%s1 + $0x38] sm:$0xff]
    %v24 = vld [vmem:[%s1 + $0x40] sm:$0xff]
    %v25 = vlaneseq
    %v26 = vand.u32 %v25, 127
    %27 = vset.pattern.permute.xlu0 0
    %28 = vperm.xlu0 %27, %v15
    %v29 = vpop.permute.xlu0 %28
    %vm30 = vcmp.eq.s32.totalorder %v29, %v26
    %31 = vset.pattern.permute.xlu0 8
    %32 = vperm.xlu0 %31, %v15
    %v33 = vpop.permute.xlu0 %32
    %vm34 = vcmp.eq.s32.totalorder %v33, %v26
    %vm35 = vmor %vm30, %vm34
    %36 = vset.pattern.permute.xlu0 16
    %37 = vperm.xlu0 %36, %v15
    %v38 = vpop.permute.xlu0 %37
    %vm39 = vcmp.eq.s32.totalorder %v38, %v26
    %vm40 = vmor %vm35, %vm39
    %v41 = vsel %vm40, 1, 0
    %v42 = vcvt.s32.f32 %v41
    %vm43 = vcmask 588800
    %v45 = vsel %vm43, %v42, 0
    %47 = vmatprep.subr.mxu0 0.0
    %48 = vmatpush1.msra.mxu0 0.0
    %49 = vmatprep.subr.mxu0 0.0
    %50 = vmatpush1.msra.mxu0 0.0
    %51 = vmatprep.subr.mxu0 0.0
    %52 = vmatpush1.msra.mxu0 0.0
    %53 = vmatprep.subr.mxu0 0.0
    %54 = vmatpush1.msra.mxu0 0.0
    %55 = vmatprep.subr.mxu0 0.0
    %56 = vmatpush1.msra.mxu0 0.0
    %57 = vmatprep.subr.mxu0 0.0
    %58 = vmatpush1.msra.mxu0 0.0
    %59 = vmatprep.subr.mxu0 0.0
    %60 = vmatpush1.msra.mxu0 0.0
    %61 = vmatprep.subr.mxu0 0.0
    %62 = vmatpush1.msra.mxu0 %v24
    %63 = vmatprep.subr.mxu0 0.0
    %64 = vmatpush1.msra.mxu0 %v23
    %65 = vmatprep.subr.mxu0 0.0
    %66 = vmatpush1.msra.mxu0 %v22
    %67 = vmatprep.subr.mxu0 0.0
    %68 = vmatpush1.msra.mxu0 %v21
    %69 = vmatprep.subr.mxu0 0.0
    %70 = vmatpush1.msra.mxu0 %v20
    %71 = vmatprep.subr.mxu0 0.0
    %72 = vmatpush1.msra.mxu0 %v19
    %73 = vmatprep.subr.mxu0 0.0
    %74 = vmatpush1.msra.mxu0 %v18
    %75 = vmatprep.subr.mxu0 0.0
    %76 = vmatpush1.msra.mxu0 %v17
    %77 = vmatprep.subr.mxu0 0.0
    %78 = vmatpush1.msra.mxu0 %v16
    %79 = vmatprep.subr.mxu0 0.0
    %80 = vmatpush2.msra.mxu0 0.0
    %81 = vmatprep.subr.mxu0 0.0
    %82 = vmatpush2.msra.mxu0 0.0
    %83 = vmatprep.subr.mxu0 0.0
    %84 = vmatpush2.msra.mxu0 0.0
    %85 = vmatprep.subr.mxu0 0.0
    %86 = vmatpush2.msra.mxu0 0.0
    %87 = vmatprep.subr.mxu0 0.0
    %88 = vmatpush2.msra.mxu0 0.0
    %89 = vmatprep.subr.mxu0 0.0
    %90 = vmatpush2.msra.mxu0 0.0
    %91 = vmatprep.subr.mxu0 0.0
    %92 = vmatpush2.msra.mxu0 0.0
    %93 = vmatprep.subr.mxu0 0.0
    %94 = vmatpush2.msra.mxu0 0.0
    %95 = vmatprep.subr.mxu0 0.0
    %96 = vmatpush2.msra.mxu0 0.0
    %97 = vmatprep.subr.mxu0 0.0
    %98 = vmatpush2.msra.mxu0 0.0
    %99 = vmatprep.subr.mxu0 0.0
    %100 = vmatpush2.msra.mxu0 0.0
    %101 = vmatprep.subr.mxu0 0.0
    %102 = vmatpush2.msra.mxu0 0.0
    %103 = vmatprep.subr.mxu0 0.0
    %104 = vmatpush2.msra.mxu0 0.0
    %105 = vmatprep.subr.mxu0 0.0
    %106 = vmatpush2.msra.mxu0 0.0
    %107 = vmatprep.subr.mxu0 0.0
    %108 = vmatpush2.msra.mxu0 0.0
    %109 = vmatprep.subr.mxu0 0.0
    %110 = vmatpush2.msra.mxu0 0.0
    %111 = vmatprep.mubr.f32.mxu0 0.0
    %112 = vmatmul.mubr.f32.gmra.mxu0 %v45
    %v113 = vpop.f32.mrf.mxu0
    %v114 = vadd.f32 0.0, %v113
    %v115 = vpop.f32.mrf.mxu0
    %116 = vdwg.mxu0
    %117 = vset.pattern.permute.xlu0 1
    %118 = vperm.xlu0 %117, %v15
    %v119 = vpop.permute.xlu0 %118
    %vm120 = vcmp.eq.s32.totalorder %v119, %v26
    %121 = vset.pattern.permute.xlu0 9
    %122 = vperm.xlu0 %121, %v15
    %v123 = vpop.permute.xlu0 %122
    %vm124 = vcmp.eq.s32.totalorder %v123, %v26
    %vm125 = vmor %vm120, %vm124
    %126 = vset.pattern.permute.xlu0 17
    %127 = vperm.xlu0 %126, %v15
    %v128 = vpop.permute.xlu0 %127
    %vm129 = vcmp.eq.s32.totalorder %v128, %v26
    %vm130 = vmor %vm125, %vm129
    %v131 = vsel %vm130, 1, 0
    %v132 = vcvt.s32.f32 %v131
    %v134 = vsel %vm43, %v132, 0
    %136 = vmatprep.subr.mxu0 0.0
    %137 = vmatpush1.msra.mxu0 0.0
    %138 = vmatprep.subr.mxu0 0.0
    %139 = vmatpush1.msra.mxu0 0.0
    %140 = vmatprep.subr.mxu0 0.0
    %141 = vmatpush1.msra.mxu0 0.0
    %142 = vmatprep.subr.mxu0 0.0
    %143 = vmatpush1.msra.mxu0 0.0
    %144 = vmatprep.subr.mxu0 0.0
    %145 = vmatpush1.msra.mxu0 0.0
    %146 = vmatprep.subr.mxu0 0.0
    %147 = vmatpush1.msra.mxu0 0.0
    %148 = vmatprep.subr.mxu0 0.0
    %149 = vmatpush1.msra.mxu0 0.0
    %150 = vmatprep.subr.mxu0 0.0
    %151 = vmatpush1.msra.mxu0 %v24
    %152 = vmatprep.subr.mxu0 0.0
    %153 = vmatpush1.msra.mxu0 %v23
    %154 = vmatprep.subr.mxu0 0.0
    %155 = vmatpush1.msra.mxu0 %v22
    %156 = vmatprep.subr.mxu0 0.0
    %157 = vmatpush1.msra.mxu0 %v21
    %158 = vmatprep.subr.mxu0 0.0
    %159 = vmatpush1.msra.mxu0 %v20
    %160 = vmatprep.subr.mxu0 0.0
    %161 = vmatpush1.msra.mxu0 %v19
    %162 = vmatprep.subr.mxu0 0.0
    %163 = vmatpush1.msra.mxu0 %v18
    %164 = vmatprep.subr.mxu0 0.0
    %165 = vmatpush1.msra.mxu0 %v17
    %166 = vmatprep.subr.mxu0 0.0
    %167 = vmatpush1.msra.mxu0 %v16
    %168 = vmatprep.subr.mxu0 0.0
    %169 = vmatpush2.msra.mxu0 0.0
    %170 = vmatprep.subr.mxu0 0.0
    %171 = vmatpush2.msra.mxu0 0.0
    %172 = vmatprep.subr.mxu0 0.0
    %173 = vmatpush2.msra.mxu0 0.0
    %174 = vmatprep.subr.mxu0 0.0
    %175 = vmatpush2.msra.mxu0 0.0
    %176 = vmatprep.subr.mxu0 0.0
    %177 = vmatpush2.msra.mxu0 0.0
    %178 = vmatprep.subr.mxu0 0.0
    %179 = vmatpush2.msra.mxu0 0.0
    %180 = vmatprep.subr.mxu0 0.0
    %181 = vmatpush2.msra.mxu0 0.0
    %182 = vmatprep.subr.mxu0 0.0
    %183 = vmatpush2.msra.mxu0 0.0
    %184 = vmatprep.subr.mxu0 0.0
    %185 = vmatpush2.msra.mxu0 0.0
    %186 = vmatprep.subr.mxu0 0.0
    %187 = vmatpush2.msra.mxu0 0.0
    %188 = vmatprep.subr.mxu0 0.0
    %189 = vmatpush2.msra.mxu0 0.0
    %190 = vmatprep.subr.mxu0 0.0
    %191 = vmatpush2.msra.mxu0 0.0
    %192 = vmatprep.subr.mxu0 0.0
    %193 = vmatpush2.msra.mxu0 0.0
    %194 = vmatprep.subr.mxu0 0.0
    %195 = vmatpush2.msra.mxu0 0.0
    %196 = vmatprep.subr.mxu0 0.0
    %197 = vmatpush2.msra.mxu0 0.0
    %198 = vmatprep.subr.mxu0 0.0
    %199 = vmatpush2.msra.mxu0 0.0
    %200 = vmatprep.mubr.f32.mxu0 0.0
    %201 = vmatmul.mubr.f32.gmra.mxu0 %v134
    %v202 = vpop.f32.mrf.mxu0
    %v203 = vadd.f32 0.0, %v202
    %v204 = vpop.f32.mrf.mxu0
    %205 = vdwg.mxu0
    %206 = vset.pattern.permute.xlu0 2
    %207 = vperm.xlu0 %206, %v15
    %v208 = vpop.permute.xlu0 %207
    %vm209 = vcmp.eq.s32.totalorder %v208, %v26
    %210 = vset.pattern.permute.xlu0 10
    %211 = vperm.xlu0 %210, %v15
    %v212 = vpop.permute.xlu0 %211
    %vm213 = vcmp.eq.s32.totalorder %v212, %v26
    %vm214 = vmor %vm209, %vm213
    %215 = vset.pattern.permute.xlu0 18
    %216 = vperm.xlu0 %215, %v15
    %v217 = vpop.permute.xlu0 %216
    %vm218 = vcmp.eq.s32.totalorder %v217, %v26
    %vm219 = vmor %vm214, %vm218
    %v220 = vsel %vm219, 1, 0
    %v221 = vcvt.s32.f32 %v220
    %v223 = vsel %vm43, %v221, 0
    %225 = vmatprep.subr.mxu0 0.0
    %226 = vmatpush1.msra.mxu0 0.0
    %227 = vmatprep.subr.mxu0 0.0
    %228 = vmatpush1.msra.mxu0 0.0
    %229 = vmatprep.subr.mxu0 0.0
    %230 = vmatpush1.msra.mxu0 0.0
    %231 = vmatprep.subr.mxu0 0.0
    %232 = vmatpush1.msra.mxu0 0.0
    %233 = vmatprep.subr.mxu0 0.0
    %234 = vmatpush1.msra.mxu0 0.0
    %235 = vmatprep.subr.mxu0 0.0
    %236 = vmatpush1.msra.mxu0 0.0
    %237 = vmatprep.subr.mxu0 0.0
    %238 = vmatpush1.msra.mxu0 0.0
    %239 = vmatprep.subr.mxu0 0.0
    %240 = vmatpush1.msra.mxu0 %v24
    %241 = vmatprep.subr.mxu0 0.0
    %242 = vmatpush1.msra.mxu0 %v23
    %243 = vmatprep.subr.mxu0 0.0
    %244 = vmatpush1.msra.mxu0 %v22
    %245 = vmatprep.subr.mxu0 0.0
    %246 = vmatpush1.msra.mxu0 %v21
    %247 = vmatprep.subr.mxu0 0.0
    %248 = vmatpush1.msra.mxu0 %v20
    %249 = vmatprep.subr.mxu0 0.0
    %250 = vmatpush1.msra.mxu0 %v19
    %251 = vmatprep.subr.mxu0 0.0
    %252 = vmatpush1.msra.mxu0 %v18
    %253 = vmatprep.subr.mxu0 0.0
    %254 = vmatpush1.msra.mxu0 %v17
    %255 = vmatprep.subr.mxu0 0.0
    %256 = vmatpush1.msra.mxu0 %v16
    %257 = vmatprep.subr.mxu0 0.0
    %258 = vmatpush2.msra.mxu0 0.0
    %259 = vmatprep.subr.mxu0 0.0
    %260 = vmatpush2.msra.mxu0 0.0
    %261 = vmatprep.subr.mxu0 0.0
    %262 = vmatpush2.msra.mxu0 0.0
    %263 = vmatprep.subr.mxu0 0.0
    %264 = vmatpush2.msra.mxu0 0.0
    %265 = vmatprep.subr.mxu0 0.0
    %266 = vmatpush2.msra.mxu0 0.0
    %267 = vmatprep.subr.mxu0 0.0
    %268 = vmatpush2.msra.mxu0 0.0
    %269 = vmatprep.subr.mxu0 0.0
    %270 = vmatpush2.msra.mxu0 0.0
    %271 = vmatprep.subr.mxu0 0.0
    %272 = vmatpush2.msra.mxu0 0.0
    %273 = vmatprep.subr.mxu0 0.0
    %274 = vmatpush2.msra.mxu0 0.0
    %275 = vmatprep.subr.mxu0 0.0
    %276 = vmatpush2.msra.mxu0 0.0
    %277 = vmatprep.subr.mxu0 0.0
    %278 = vmatpush2.msra.mxu0 0.0
    %279 = vmatprep.subr.mxu0 0.0
    %280 = vmatpush2.msra.mxu0 0.0
    %281 = vmatprep.subr.mxu0 0.0
    %282 = vmatpush2.msra.mxu0 0.0
    %283 = vmatprep.subr.mxu0 0.0
    %284 = vmatpush2.msra.mxu0 0.0
    %285 = vmatprep.subr.mxu0 0.0
    %286 = vmatpush2.msra.mxu0 0.0
    %287 = vmatprep.subr.mxu0 0.0
    %288 = vmatpush2.msra.mxu0 0.0
    %289 = vmatprep.mubr.f32.mxu0 0.0
    %290 = vmatmul.mubr.f32.gmra.mxu0 %v223
    %v291 = vpop.f32.mrf.mxu0
    %v292 = vadd.f32 0.0, %v291
    %v293 = vpop.f32.mrf.mxu0
    %294 = vdwg.mxu0
    %295 = vset.pattern.permute.xlu0 3
    %296 = vperm.xlu0 %295, %v15
    %v297 = vpop.permute.xlu0 %296
    %vm298 = vcmp.eq.s32.totalorder %v297, %v26
    %299 = vset.pattern.permute.xlu0 11
    %300 = vperm.xlu0 %299, %v15
    %v301 = vpop.permute.xlu0 %300
    %vm302 = vcmp.eq.s32.totalorder %v301, %v26
    %vm303 = vmor %vm298, %vm302
    %304 = vset.pattern.permute.xlu0 19
    %305 = vperm.xlu0 %304, %v15
    %v306 = vpop.permute.xlu0 %305
    %vm307 = vcmp.eq.s32.totalorder %v306, %v26
    %vm308 = vmor %vm303, %vm307
    %v309 = vsel %vm308, 1, 0
    %v310 = vcvt.s32.f32 %v309
    %v312 = vsel %vm43, %v310, 0
    %314 = vmatprep.subr.mxu0 0.0
    %315 = vmatpush1.msra.mxu0 0.0
    %316 = vmatprep.subr.mxu0 0.0
    %317 = vmatpush1.msra.mxu0 0.0
    %318 = vmatprep.subr.mxu0 0.0
    %319 = vmatpush1.msra.mxu0 0.0
    %320 = vmatprep.subr.mxu0 0.0
    %321 = vmatpush1.msra.mxu0 0.0
    %322 = vmatprep.subr.mxu0 0.0
    %323 = vmatpush1.msra.mxu0 0.0
    %324 = vmatprep.subr.mxu0 0.0
    %325 = vmatpush1.msra.mxu0 0.0
    %326 = vmatprep.subr.mxu0 0.0
    %327 = vmatpush1.msra.mxu0 0.0
    %328 = vmatprep.subr.mxu0 0.0
    %329 = vmatpush1.msra.mxu0 %v24
    %330 = vmatprep.subr.mxu0 0.0
    %331 = vmatpush1.msra.mxu0 %v23
    %332 = vmatprep.subr.mxu0 0.0
    %333 = vmatpush1.msra.mxu0 %v22
    %334 = vmatprep.subr.mxu0 0.0
    %335 = vmatpush1.msra.mxu0 %v21
    %336 = vmatprep.subr.mxu0 0.0
    %337 = vmatpush1.msra.mxu0 %v20
    %338 = vmatprep.subr.mxu0 0.0
    %339 = vmatpush1.msra.mxu0 %v19
    %340 = vmatprep.subr.mxu0 0.0
    %341 = vmatpush1.msra.mxu0 %v18
    %342 = vmatprep.subr.mxu0 0.0
    %343 = vmatpush1.msra.mxu0 %v17
    %344 = vmatprep.subr.mxu0 0.0
    %345 = vmatpush1.msra.mxu0 %v16
    %346 = vmatprep.subr.mxu0 0.0
    %347 = vmatpush2.msra.mxu0 0.0
    %348 = vmatprep.subr.mxu0 0.0
    %349 = vmatpush2.msra.mxu0 0.0
    %350 = vmatprep.subr.mxu0 0.0
    %351 = vmatpush2.msra.mxu0 0.0
    %352 = vmatprep.subr.mxu0 0.0
    %353 = vmatpush2.msra.mxu0 0.0
    %354 = vmatprep.subr.mxu0 0.0
    %355 = vmatpush2.msra.mxu0 0.0
    %356 = vmatprep.subr.mxu0 0.0
    %357 = vmatpush2.msra.mxu0 0.0
    %358 = vmatprep.subr.mxu0 0.0
    %359 = vmatpush2.msra.mxu0 0.0
    %360 = vmatprep.subr.mxu0 0.0
    %361 = vmatpush2.msra.mxu0 0.0
    %362 = vmatprep.subr.mxu0 0.0
    %363 = vmatpush2.msra.mxu0 0.0
    %364 = vmatprep.subr.mxu0 0.0
    %365 = vmatpush2.msra.mxu0 0.0
    %366 = vmatprep.subr.mxu0 0.0
    %367 = vmatpush2.msra.mxu0 0.0
    %368 = vmatprep.subr.mxu0 0.0
    %369 = vmatpush2.msra.mxu0 0.0
    %370 = vmatprep.subr.mxu0 0.0
    %371 = vmatpush2.msra.mxu0 0.0
    %372 = vmatprep.subr.mxu0 0.0
    %373 = vmatpush2.msra.mxu0 0.0
    %374 = vmatprep.subr.mxu0 0.0
    %375 = vmatpush2.msra.mxu0 0.0
    %376 = vmatprep.subr.mxu0 0.0
    %377 = vmatpush2.msra.mxu0 0.0
    %378 = vmatprep.mubr.f32.mxu0 0.0
    %379 = vmatmul.mubr.f32.gmra.mxu0 %v312
    %v380 = vpop.f32.mrf.mxu0
    %v381 = vadd.f32 0.0, %v380
    %v382 = vpop.f32.mrf.mxu0
    %383 = vdwg.mxu0
    %384 = vset.pattern.permute.xlu0 4
    %385 = vperm.xlu0 %384, %v15
    %v386 = vpop.permute.xlu0 %385
    %vm387 = vcmp.eq.s32.totalorder %v386, %v26
    %388 = vset.pattern.permute.xlu0 12
    %389 = vperm.xlu0 %388, %v15
    %v390 = vpop.permute.xlu0 %389
    %vm391 = vcmp.eq.s32.totalorder %v390, %v26
    %vm392 = vmor %vm387, %vm391
    %393 = vset.pattern.permute.xlu0 20
    %394 = vperm.xlu0 %393, %v15
    %v395 = vpop.permute.xlu0 %394
    %vm396 = vcmp.eq.s32.totalorder %v395, %v26
    %vm397 = vmor %vm392, %vm396
    %v398 = vsel %vm397, 1, 0
    %v399 = vcvt.s32.f32 %v398
    %v401 = vsel %vm43, %v399, 0
    %403 = vmatprep.subr.mxu0 0.0
    %404 = vmatpush1.msra.mxu0 0.0
    %405 = vmatprep.subr.mxu0 0.0
    %406 = vmatpush1.msra.mxu0 0.0
    %407 = vmatprep.subr.mxu0 0.0
    %408 = vmatpush1.msra.mxu0 0.0
    %409 = vmatprep.subr.mxu0 0.0
    %410 = vmatpush1.msra.mxu0 0.0
    %411 = vmatprep.subr.mxu0 0.0
    %412 = vmatpush1.msra.mxu0 0.0
    %413 = vmatprep.subr.mxu0 0.0
    %414 = vmatpush1.msra.mxu0 0.0
    %415 = vmatprep.subr.mxu0 0.0
    %416 = vmatpush1.msra.mxu0 0.0
    %417 = vmatprep.subr.mxu0 0.0
    %418 = vmatpush1.msra.mxu0 %v24
    %419 = vmatprep.subr.mxu0 0.0
    %420 = vmatpush1.msra.mxu0 %v23
    %421 = vmatprep.subr.mxu0 0.0
    %422 = vmatpush1.msra.mxu0 %v22
    %423 = vmatprep.subr.mxu0 0.0
    %424 = vmatpush1.msra.mxu0 %v21
    %425 = vmatprep.subr.mxu0 0.0
    %426 = vmatpush1.msra.mxu0 %v20
    %427 = vmatprep.subr.mxu0 0.0
    %428 = vmatpush1.msra.mxu0 %v19
    %429 = vmatprep.subr.mxu0 0.0
    %430 = vmatpush1.msra.mxu0 %v18
    %431 = vmatprep.subr.mxu0 0.0
    %432 = vmatpush1.msra.mxu0 %v17
    %433 = vmatprep.subr.mxu0 0.0
    %434 = vmatpush1.msra.mxu0 %v16
    %435 = vmatprep.subr.mxu0 0.0
    %436 = vmatpush2.msra.mxu0 0.0
    %437 = vmatprep.subr.mxu0 0.0
    %438 = vmatpush2.msra.mxu0 0.0
    %439 = vmatprep.subr.mxu0 0.0
    %440 = vmatpush2.msra.mxu0 0.0
    %441 = vmatprep.subr.mxu0 0.0
    %442 = vmatpush2.msra.mxu0 0.0
    %443 = vmatprep.subr.mxu0 0.0
    %444 = vmatpush2.msra.mxu0 0.0
    %445 = vmatprep.subr.mxu0 0.0
    %446 = vmatpush2.msra.mxu0 0.0
    %447 = vmatprep.subr.mxu0 0.0
    %448 = vmatpush2.msra.mxu0 0.0
    %449 = vmatprep.subr.mxu0 0.0
    %450 = vmatpush2.msra.mxu0 0.0
    %451 = vmatprep.subr.mxu0 0.0
    %452 = vmatpush2.msra.mxu0 0.0
    %453 = vmatprep.subr.mxu0 0.0
    %454 = vmatpush2.msra.mxu0 0.0
    %455 = vmatprep.subr.mxu0 0.0
    %456 = vmatpush2.msra.mxu0 0.0
    %457 = vmatprep.subr.mxu0 0.0
    %458 = vmatpush2.msra.mxu0 0.0
    %459 = vmatprep.subr.mxu0 0.0
    %460 = vmatpush2.msra.mxu0 0.0
    %461 = vmatprep.subr.mxu0 0.0
    %462 = vmatpush2.msra.mxu0 0.0
    %463 = vmatprep.subr.mxu0 0.0
    %464 = vmatpush2.msra.mxu0 0.0
    %465 = vmatprep.subr.mxu0 0.0
    %466 = vmatpush2.msra.mxu0 0.0
    %467 = vmatprep.mubr.f32.mxu0 0.0
    %468 = vmatmul.mubr.f32.gmra.mxu0 %v401
    %v469 = vpop.f32.mrf.mxu0
    %v470 = vadd.f32 0.0, %v469
    %v471 = vpop.f32.mrf.mxu0
    %472 = vdwg.mxu0
    %473 = vset.pattern.permute.xlu0 5
    %474 = vperm.xlu0 %473, %v15
    %v475 = vpop.permute.xlu0 %474
    %vm476 = vcmp.eq.s32.totalorder %v475, %v26
    %477 = vset.pattern.permute.xlu0 13
    %478 = vperm.xlu0 %477, %v15
    %v479 = vpop.permute.xlu0 %478
    %vm480 = vcmp.eq.s32.totalorder %v479, %v26
    %vm481 = vmor %vm476, %vm480
    %482 = vset.pattern.permute.xlu0 21
    %483 = vperm.xlu0 %482, %v15
    %v484 = vpop.permute.xlu0 %483
    %vm485 = vcmp.eq.s32.totalorder %v484, %v26
    %vm486 = vmor %vm481, %vm485
    %v487 = vsel %vm486, 1, 0
    %v488 = vcvt.s32.f32 %v487
    %v490 = vsel %vm43, %v488, 0
    %492 = vmatprep.subr.mxu0 0.0
    %493 = vmatpush1.msra.mxu0 0.0
    %494 = vmatprep.subr.mxu0 0.0
    %495 = vmatpush1.msra.mxu0 0.0
    %496 = vmatprep.subr.mxu0 0.0
    %497 = vmatpush1.msra.mxu0 0.0
    %498 = vmatprep.subr.mxu0 0.0
    %499 = vmatpush1.msra.mxu0 0.0
    %500 = vmatprep.subr.mxu0 0.0
    %501 = vmatpush1.msra.mxu0 0.0
    %502 = vmatprep.subr.mxu0 0.0
    %503 = vmatpush1.msra.mxu0 0.0
    %504 = vmatprep.subr.mxu0 0.0
    %505 = vmatpush1.msra.mxu0 0.0
    %506 = vmatprep.subr.mxu0 0.0
    %507 = vmatpush1.msra.mxu0 %v24
    %508 = vmatprep.subr.mxu0 0.0
    %509 = vmatpush1.msra.mxu0 %v23
    %510 = vmatprep.subr.mxu0 0.0
    %511 = vmatpush1.msra.mxu0 %v22
    %512 = vmatprep.subr.mxu0 0.0
    %513 = vmatpush1.msra.mxu0 %v21
    %514 = vmatprep.subr.mxu0 0.0
    %515 = vmatpush1.msra.mxu0 %v20
    %516 = vmatprep.subr.mxu0 0.0
    %517 = vmatpush1.msra.mxu0 %v19
    %518 = vmatprep.subr.mxu0 0.0
    %519 = vmatpush1.msra.mxu0 %v18
    %520 = vmatprep.subr.mxu0 0.0
    %521 = vmatpush1.msra.mxu0 %v17
    %522 = vmatprep.subr.mxu0 0.0
    %523 = vmatpush1.msra.mxu0 %v16
    %524 = vmatprep.subr.mxu0 0.0
    %525 = vmatpush2.msra.mxu0 0.0
    %526 = vmatprep.subr.mxu0 0.0
    %527 = vmatpush2.msra.mxu0 0.0
    %528 = vmatprep.subr.mxu0 0.0
    %529 = vmatpush2.msra.mxu0 0.0
    %530 = vmatprep.subr.mxu0 0.0
    %531 = vmatpush2.msra.mxu0 0.0
    %532 = vmatprep.subr.mxu0 0.0
    %533 = vmatpush2.msra.mxu0 0.0
    %534 = vmatprep.subr.mxu0 0.0
    %535 = vmatpush2.msra.mxu0 0.0
    %536 = vmatprep.subr.mxu0 0.0
    %537 = vmatpush2.msra.mxu0 0.0
    %538 = vmatprep.subr.mxu0 0.0
    %539 = vmatpush2.msra.mxu0 0.0
    %540 = vmatprep.subr.mxu0 0.0
    %541 = vmatpush2.msra.mxu0 0.0
    %542 = vmatprep.subr.mxu0 0.0
    %543 = vmatpush2.msra.mxu0 0.0
    %544 = vmatprep.subr.mxu0 0.0
    %545 = vmatpush2.msra.mxu0 0.0
    %546 = vmatprep.subr.mxu0 0.0
    %547 = vmatpush2.msra.mxu0 0.0
    %548 = vmatprep.subr.mxu0 0.0
    %549 = vmatpush2.msra.mxu0 0.0
    %550 = vmatprep.subr.mxu0 0.0
    %551 = vmatpush2.msra.mxu0 0.0
    %552 = vmatprep.subr.mxu0 0.0
    %553 = vmatpush2.msra.mxu0 0.0
    %554 = vmatprep.subr.mxu0 0.0
    %555 = vmatpush2.msra.mxu0 0.0
    %556 = vmatprep.mubr.f32.mxu0 0.0
    %557 = vmatmul.mubr.f32.gmra.mxu0 %v490
    %v558 = vpop.f32.mrf.mxu0
    %v559 = vadd.f32 0.0, %v558
    %v560 = vpop.f32.mrf.mxu0
    %561 = vdwg.mxu0
    %562 = vset.pattern.permute.xlu0 6
    %563 = vperm.xlu0 %562, %v15
    %v564 = vpop.permute.xlu0 %563
    %vm565 = vcmp.eq.s32.totalorder %v564, %v26
    %566 = vset.pattern.permute.xlu0 14
    %567 = vperm.xlu0 %566, %v15
    %v568 = vpop.permute.xlu0 %567
    %vm569 = vcmp.eq.s32.totalorder %v568, %v26
    %vm570 = vmor %vm565, %vm569
    %571 = vset.pattern.permute.xlu0 22
    %572 = vperm.xlu0 %571, %v15
    %v573 = vpop.permute.xlu0 %572
    %vm574 = vcmp.eq.s32.totalorder %v573, %v26
    %vm575 = vmor %vm570, %vm574
    %v576 = vsel %vm575, 1, 0
    %v577 = vcvt.s32.f32 %v576
    %v579 = vsel %vm43, %v577, 0
    %581 = vmatprep.subr.mxu0 0.0
    %582 = vmatpush1.msra.mxu0 0.0
    %583 = vmatprep.subr.mxu0 0.0
    %584 = vmatpush1.msra.mxu0 0.0
    %585 = vmatprep.subr.mxu0 0.0
    %586 = vmatpush1.msra.mxu0 0.0
    %587 = vmatprep.subr.mxu0 0.0
    %588 = vmatpush1.msra.mxu0 0.0
    %589 = vmatprep.subr.mxu0 0.0
    %590 = vmatpush1.msra.mxu0 0.0
    %591 = vmatprep.subr.mxu0 0.0
    %592 = vmatpush1.msra.mxu0 0.0
    %593 = vmatprep.subr.mxu0 0.0
    %594 = vmatpush1.msra.mxu0 0.0
    %595 = vmatprep.subr.mxu0 0.0
    %596 = vmatpush1.msra.mxu0 %v24
    %597 = vmatprep.subr.mxu0 0.0
    %598 = vmatpush1.msra.mxu0 %v23
    %599 = vmatprep.subr.mxu0 0.0
    %600 = vmatpush1.msra.mxu0 %v22
    %601 = vmatprep.subr.mxu0 0.0
    %602 = vmatpush1.msra.mxu0 %v21
    %603 = vmatprep.subr.mxu0 0.0
    %604 = vmatpush1.msra.mxu0 %v20
    %605 = vmatprep.subr.mxu0 0.0
    %606 = vmatpush1.msra.mxu0 %v19
    %607 = vmatprep.subr.mxu0 0.0
    %608 = vmatpush1.msra.mxu0 %v18
    %609 = vmatprep.subr.mxu0 0.0
    %610 = vmatpush1.msra.mxu0 %v17
    %611 = vmatprep.subr.mxu0 0.0
    %612 = vmatpush1.msra.mxu0 %v16
    %613 = vmatprep.subr.mxu0 0.0
    %614 = vmatpush2.msra.mxu0 0.0
    %615 = vmatprep.subr.mxu0 0.0
    %616 = vmatpush2.msra.mxu0 0.0
    %617 = vmatprep.subr.mxu0 0.0
    %618 = vmatpush2.msra.mxu0 0.0
    %619 = vmatprep.subr.mxu0 0.0
    %620 = vmatpush2.msra.mxu0 0.0
    %621 = vmatprep.subr.mxu0 0.0
    %622 = vmatpush2.msra.mxu0 0.0
    %623 = vmatprep.subr.mxu0 0.0
    %624 = vmatpush2.msra.mxu0 0.0
    %625 = vmatprep.subr.mxu0 0.0
    %626 = vmatpush2.msra.mxu0 0.0
    %627 = vmatprep.subr.mxu0 0.0
    %628 = vmatpush2.msra.mxu0 0.0
    %629 = vmatprep.subr.mxu0 0.0
    %630 = vmatpush2.msra.mxu0 0.0
    %631 = vmatprep.subr.mxu0 0.0
    %632 = vmatpush2.msra.mxu0 0.0
    %633 = vmatprep.subr.mxu0 0.0
    %634 = vmatpush2.msra.mxu0 0.0
    %635 = vmatprep.subr.mxu0 0.0
    %636 = vmatpush2.msra.mxu0 0.0
    %637 = vmatprep.subr.mxu0 0.0
    %638 = vmatpush2.msra.mxu0 0.0
    %639 = vmatprep.subr.mxu0 0.0
    %640 = vmatpush2.msra.mxu0 0.0
    %641 = vmatprep.subr.mxu0 0.0
    %642 = vmatpush2.msra.mxu0 0.0
    %643 = vmatprep.subr.mxu0 0.0
    %644 = vmatpush2.msra.mxu0 0.0
    %645 = vmatprep.mubr.f32.mxu0 0.0
    %646 = vmatmul.mubr.f32.gmra.mxu0 %v579
    %v647 = vpop.f32.mrf.mxu0
    %v648 = vadd.f32 0.0, %v647
    %v649 = vpop.f32.mrf.mxu0
    %650 = vdwg.mxu0
    %651 = vset.pattern.permute.xlu0 7
    %652 = vperm.xlu0 %651, %v15
    %v653 = vpop.permute.xlu0 %652
    %vm654 = vcmp.eq.s32.totalorder %v653, %v26
    %655 = vset.pattern.permute.xlu0 15
    %656 = vperm.xlu0 %655, %v15
    %v657 = vpop.permute.xlu0 %656
    %vm658 = vcmp.eq.s32.totalorder %v657, %v26
    %vm659 = vmor %vm654, %vm658
    %660 = vset.pattern.permute.xlu0 23
    %661 = vperm.xlu0 %660, %v15
    %v662 = vpop.permute.xlu0 %661
    %vm663 = vcmp.eq.s32.totalorder %v662, %v26
    %vm664 = vmor %vm659, %vm663
    %v665 = vsel %vm664, 1, 0
    %v666 = vcvt.s32.f32 %v665
    %v668 = vsel %vm43, %v666, 0
    %670 = vmatprep.subr.mxu0 0.0
    %671 = vmatpush1.msra.mxu0 0.0
    %672 = vmatprep.subr.mxu0 0.0
    %673 = vmatpush1.msra.mxu0 0.0
    %674 = vmatprep.subr.mxu0 0.0
    %675 = vmatpush1.msra.mxu0 0.0
    %676 = vmatprep.subr.mxu0 0.0
    %677 = vmatpush1.msra.mxu0 0.0
    %678 = vmatprep.subr.mxu0 0.0
    %679 = vmatpush1.msra.mxu0 0.0
    %680 = vmatprep.subr.mxu0 0.0
    %681 = vmatpush1.msra.mxu0 0.0
    %682 = vmatprep.subr.mxu0 0.0
    %683 = vmatpush1.msra.mxu0 0.0
    %684 = vmatprep.subr.mxu0 0.0
    %685 = vmatpush1.msra.mxu0 %v24
    %686 = vmatprep.subr.mxu0 0.0
    %687 = vmatpush1.msra.mxu0 %v23
    %688 = vmatprep.subr.mxu0 0.0
    %689 = vmatpush1.msra.mxu0 %v22
    %690 = vmatprep.subr.mxu0 0.0
    %691 = vmatpush1.msra.mxu0 %v21
    %692 = vmatprep.subr.mxu0 0.0
    %693 = vmatpush1.msra.mxu0 %v20
    %694 = vmatprep.subr.mxu0 0.0
    %695 = vmatpush1.msra.mxu0 %v19
    %696 = vmatprep.subr.mxu0 0.0
    %697 = vmatpush1.msra.mxu0 %v18
    %698 = vmatprep.subr.mxu0 0.0
    %699 = vmatpush1.msra.mxu0 %v17
    %700 = vmatprep.subr.mxu0 0.0
    %701 = vmatpush1.msra.mxu0 %v16
    %702 = vmatprep.subr.mxu0 0.0
    %703 = vmatpush2.msra.mxu0 0.0
    %704 = vmatprep.subr.mxu0 0.0
    %705 = vmatpush2.msra.mxu0 0.0
    %706 = vmatprep.subr.mxu0 0.0
    %707 = vmatpush2.msra.mxu0 0.0
    %708 = vmatprep.subr.mxu0 0.0
    %709 = vmatpush2.msra.mxu0 0.0
    %710 = vmatprep.subr.mxu0 0.0
    %711 = vmatpush2.msra.mxu0 0.0
    %712 = vmatprep.subr.mxu0 0.0
    %713 = vmatpush2.msra.mxu0 0.0
    %714 = vmatprep.subr.mxu0 0.0
    %715 = vmatpush2.msra.mxu0 0.0
    %716 = vmatprep.subr.mxu0 0.0
    %717 = vmatpush2.msra.mxu0 0.0
    %718 = vmatprep.subr.mxu0 0.0
    %719 = vmatpush2.msra.mxu0 0.0
    %720 = vmatprep.subr.mxu0 0.0
    %721 = vmatpush2.msra.mxu0 0.0
    %722 = vmatprep.subr.mxu0 0.0
    %723 = vmatpush2.msra.mxu0 0.0
    %724 = vmatprep.subr.mxu0 0.0
    %725 = vmatpush2.msra.mxu0 0.0
    %726 = vmatprep.subr.mxu0 0.0
    %727 = vmatpush2.msra.mxu0 0.0
    %728 = vmatprep.subr.mxu0 0.0
    %729 = vmatpush2.msra.mxu0 0.0
    %730 = vmatprep.subr.mxu0 0.0
    %731 = vmatpush2.msra.mxu0 0.0
    %732 = vmatprep.subr.mxu0 0.0
    %733 = vmatpush2.msra.mxu0 0.0
    %734 = vmatprep.mubr.f32.mxu0 0.0
    %735 = vmatmul.mubr.f32.gmra.mxu0 %v668
    %v736 = vpop.f32.mrf.mxu0
    %v737 = vadd.f32 0.0, %v736
    %v738 = vpop.f32.mrf.mxu0
    %739 = vdwg.mxu0
    %741 = vrot.lane.b32.xlu0 %v203, 32
    %v742 = vpop.permute.xlu0 %741
    %745 = vrot.lane.b32.xlu0 %v292, 64
    %v746 = vpop.permute.xlu0 %745
    %749 = vrot.lane.b32.xlu0 %v381, 96
    %v750 = vpop.permute.xlu0 %749
    %753 = vrot.lane.b32.xlu0 %v559, 32
    %v754 = vpop.permute.xlu0 %753
    %757 = vrot.lane.b32.xlu0 %v648, 64
    %v758 = vpop.permute.xlu0 %757
    %761 = vrot.lane.b32.xlu0 %v737, 96
    %v762 = vpop.permute.xlu0 %761
    %vm764 = vcmask 261120
    %v765 = vsel %vm764, %v114, %v742
    %vm766 = vcmask 523264
    %v767 = vsel %vm766, %v765, %v746
    %vm768 = vcmask 785408
    %v769 = vsel %vm768, %v767, %v750
    %v770 = vsel %vm764, %v470, %v754
    %v771 = vsel %vm766, %v770, %v758
    %v772 = vsel %vm768, %v771, %v762
    %v773 = vld [vmem:[%s2] sm:$0x3]
    %v775 = vlaneseq
    %v776 = vshrl.u32 %v775, 7
    %v777 = vsub.s32 0, %v776
    %v778 = vrot.slane %v773, %v777
    %v779 = vlaneseq
    %v780 = vshrl.u32 %v779, 7
    %v781 = vsub.s32 1, %v780
    %v782 = vrot.slane %v773, %v781
    %v785 = vadd.f32 %v769, %v778
    %v786 = vadd.f32 %v772, %v782
    %787 = vst [vmem:[#allocation2] sm:$0xff] %v785
    %788 = vst [vmem:[#allocation2 + $0x8] sm:$0xff] %v786
    // Predicated region
    $region14: #{tpu_custom_call.1} parent=1 // pred_check
      _
    $region15: #{tpu_custom_call.1} parent=1 // pred_check_branch
      %790 = sbr.rel (0) target = $region17
    $region16: #{tpu_custom_call.1} parent=1 // pred_region
      %s792 = ssub.s32 256, 256
      %793 = vsyncadd [#allocation3], %s792
      %s795 = sshll.u32 [#allocation2], 4
      %s796 = int_to_ptr.vmem [resolvable:$true] %s795
      %798 = dma.vmem_to_hbm [thread:$0]  %s796, 256, %s3, [#allocation3]
    $region17: #{tpu_custom_call.1} parent=1 // pred_fallthru
      _
    // Predicated region
    $region18: #{tpu_custom_call.1} parent=1 // pred_check
      _
    $region19: #{tpu_custom_call.1} parent=1 // pred_check_branch
      %800 = sbr.rel (0) target = $region21
    $region20: #{tpu_custom_call.1} parent=1 // pred_region
      %801 = dma.done [#allocation3], 256
    $region21: #{tpu_custom_call.1} parent=1 // pred_fallthru
      _
    %802 = vsyncpa [#allocation3], 1

</llo_original>
